<compile_context>
chip_gen: v7x
topology: tpu7x:2x2x1
jax: 0.10.0
libtpu: 0.0.40
codegen_flags: <defaults>
</compile_context>

<pallas_src>
import numpy as np
import jax
import jax.numpy as jnp
from jax.experimental import pallas as pl
from jax.experimental.pallas import tpu as pltpu


def pointconv_kernel(efeat_ref, w1_ref, w2_ref, b2_ref, out_ref):
    """One node-block of the PointConv forward.

    efeat_ref [TN*MAX_DEG, K]  per-edge features, deg-major inside the block
                               (local row = d*TN + n_local); K = F + D + 1, the
                               last column is a constant 1 (folds b1).  Padded
                               slots are all-zero.
    w1_ref    [K, H_PAD]       local_nn weight; last row holds b1.
    w2_ref    [H_PAD, C_PAD]   global_nn weight.
    b2_ref    [1, C_PAD]       global_nn bias.
    out_ref   [TN, C_PAD]      per-node output block.
    """
    tn = out_ref.shape[0]
    h_pad = w1_ref.shape[1]
    max_deg = efeat_ref.shape[0] // tn

    # local_nn: Linear (+ folded bias) + ReLU on the MXU.
    h = jnp.maximum(
        jnp.dot(efeat_ref[...], w1_ref[...], preferred_element_type=jnp.float32),
        0.0)                                             # [TN*MAX_DEG, H_PAD]

    # Scatter-max over destination node == element-wise max over MAX_DEG slabs
    # (deg-major layout).  Padded slots contribute relu(0) = 0 and every node
    # has a self-loop with relu(...) >= 0, so no validity mask is required and
    # no -inf can leak even for isolated nodes.
    agg = jnp.max(h.reshape(max_deg, tn, h_pad), axis=0)      # [TN, H_PAD]

    # global_nn: Linear.
    out_ref[...] = jnp.dot(agg, w2_ref[...],
                           preferred_element_type=jnp.float32) + b2_ref[...]


def _round_up(a, m):
    return ((a + m - 1) // m) * m


def point_conv(x, pos, edge_index, w1, b1, w2, b2, node_tile=8):
    """PointConv forward.  Host glue: self-loops, gather, degree bucketing.

    TODO(synk): host numpy preprocessing is not jittable and recompiles per
    (max_deg, n_pad) bucket; a production version would keep the gather on
    device and bucket edge counts to fixed power-of-2 sizes.
    """
    x_np = np.asarray(x, np.float32)
    pos_np = np.asarray(pos, np.float32)
    ei = np.asarray(edge_index, np.int64)
    n_nodes, n_feat = x_np.shape
    n_dim = pos_np.shape[1]
    hidden = int(w1.shape[1])
    c_out = int(w2.shape[1])

    # remove_self_loops(...) then add_self_loops(..., num_nodes=N)
    ei = ei[:, ei[0] != ei[1]]
    loops = np.stack([np.arange(n_nodes, dtype=np.int64)] * 2)
    ei = np.concatenate([ei, loops], axis=1)
    row, col = ei[0], ei[1]
    n_edges = row.shape[0]

    # per-edge features [x_j || p_j - p_i || 1]   (trailing 1 folds b1)
    e_feat = np.concatenate(
        [x_np[col], pos_np[col] - pos_np[row],
         np.ones((n_edges, 1), np.float32)], axis=1).astype(np.float32)
    k_dim = n_feat + n_dim + 1

    # Dense degree bucketing: each node gets MAX_DEG slots, deg-major per block.
    tn = node_tile                                   # multiple of 8 (sublanes)
    n_pad = _round_up(n_nodes, tn)
    deg = np.bincount(row, minlength=n_nodes)
    max_deg = _round_up(int(deg.max()), 8)

    order = np.argsort(row, kind="stable")
    sorted_row = row[order]
    seg_start = np.zeros(n_nodes, np.int64)
    seg_start[1:] = np.cumsum(deg)[:-1]
    slot = np.arange(n_edges, dtype=np.int64) - seg_start[sorted_row]

    dense_idx = ((sorted_row // tn) * (tn * max_deg)
                 + slot * tn + (sorted_row % tn))
    efeat_dense = np.zeros((n_pad * max_deg, k_dim), np.float32)
    efeat_dense[dense_idx] = e_feat[order]

    # Lane-dense (128) padding of H / C_out; fold b1 into w1's last row.
    h_pad = _round_up(max(hidden, 128), 128)
    c_pad = _round_up(max(c_out, 128), 128)
    w1_p = np.zeros((k_dim, h_pad), np.float32)
    w1_p[:n_feat + n_dim, :hidden] = np.asarray(w1, np.float32)
    w1_p[n_feat + n_dim, :hidden] = np.asarray(b1, np.float32)
    w2_p = np.zeros((h_pad, c_pad), np.float32)
    w2_p[:hidden, :c_out] = np.asarray(w2, np.float32)
    b2_p = np.zeros((1, c_pad), np.float32)
    b2_p[0, :c_out] = np.asarray(b2, np.float32)

    # TODO(synk): on v6e/v7x, casting efeat_dense / w1_p / w2_p to bf16 (keeping
    # preferred_element_type=f32) would halve HBM traffic; kept f32 for exactness.

    grid = (n_pad // tn,)
    out = pl.pallas_call(
        pointconv_kernel,
        out_shape=jax.ShapeDtypeStruct((n_pad, c_pad), jnp.float32),
        grid_spec=pltpu.PrefetchScalarGridSpec(
            num_scalar_prefetch=0,
            grid=grid,
            in_specs=[
                pl.BlockSpec((tn * max_deg, k_dim), lambda i: (i, 0)),
                pl.BlockSpec((k_dim, h_pad), lambda i: (0, 0)),
                pl.BlockSpec((h_pad, c_pad), lambda i: (0, 0)),
                pl.BlockSpec((1, c_pad), lambda i: (0, 0)),
            ],
            out_specs=pl.BlockSpec((tn, c_pad), lambda i: (i, 0)),
        ),
        compiler_params=pltpu.CompilerParams(
            dimension_semantics=("parallel",)),
    )(jnp.asarray(efeat_dense), jnp.asarray(w1_p),
      jnp.asarray(w2_p), jnp.asarray(b2_p))

    return out[:n_nodes, :c_out], (e_feat[:, :n_feat + n_dim], row)


if __name__ == "__main__":
    # Small deterministic problem.
    N, F, D, H, C_OUT, E_RAW = 16, 4, 3, 32, 8, 40

    key = jax.random.PRNGKey(0)
    kx, kp, ke, kw1, kb1, kw2, kb2 = jax.random.split(key, 7)

    x = jax.random.normal(kx, (N, F), dtype=jnp.float32)
    pos = jax.random.normal(kp, (N, D), dtype=jnp.float32)
    edge_index = jax.random.randint(ke, (2, E_RAW), 0, N, dtype=jnp.int32)

    # Deterministic parameter init (Linear layers of local_nn / global_nn).
    w1 = jax.random.normal(kw1, (F + D, H), dtype=jnp.float32) * 0.2
    b1 = jax.random.normal(kb1, (H,), dtype=jnp.float32) * 0.05
    w2 = jax.random.normal(kw2, (H, C_OUT), dtype=jnp.float32) * 0.2
    b2 = jax.random.normal(kb2, (C_OUT,), dtype=jnp.float32) * 0.05

    out, (e_feat_np, row_np) = point_conv(x, pos, edge_index, w1, b1, w2, b2)
    out = jax.block_until_ready(out)

    # Pure-numpy reference (intended PointConv semantics).
    h_ref = np.maximum(e_feat_np @ np.asarray(w1) + np.asarray(b1), 0.0)
    agg_ref = np.full((N, H), -1e30, np.float32)
    for e in range(e_feat_np.shape[0]):
        agg_ref[row_np[e]] = np.maximum(agg_ref[row_np[e]], h_ref[e])
    ref = agg_ref @ np.asarray(w2) + np.asarray(b2)

    err = np.abs(np.asarray(out) - ref).max()
    assert np.allclose(np.asarray(out), ref, rtol=1e-2, atol=1e-2), \
        f"max abs err {err}"

    print("KERNEL_OK")
</pallas_src>

<mosaic_0001>
module attributes {stable_mosaic.version = 11 : i64} {
  func.func @pointconv_kernel(%arg0: i32, %arg1: memref<64x8xf32, #tpu.memory_space<vmem>>, %arg2: memref<8x128xf32, #tpu.memory_space<vmem>>, %arg3: memref<128x128xf32, #tpu.memory_space<vmem>>, %arg4: memref<1x128xf32, #tpu.memory_space<vmem>>, %arg5: memref<8x128xf32, #tpu.memory_space<vmem>>) attributes {dimension_semantics = [#tpu.dimension_semantics<parallel>], iteration_bounds = array<i64: 2>, scalar_prefetch = 0 : i64, scratch_operands = 0 : i64, tpu.core_type = #tpu.core_type<tc>, window_params = [{transform_indices = @transform_0, window_bounds = array<i64: 64, 8>}, {pipeline_mode = #tpu.pipeline_mode<synchronous>, transform_indices = @transform_1, window_bounds = array<i64: 8, 128>}, {pipeline_mode = #tpu.pipeline_mode<synchronous>, transform_indices = @transform_2, window_bounds = array<i64: 128, 128>}, {pipeline_mode = #tpu.pipeline_mode<synchronous>, transform_indices = @transform_3, window_bounds = array<i64: 1, 128>}, {transform_indices = @transform_4, window_bounds = array<i64: 8, 128>}]} {
    %c0 = arith.constant 0 : index
    %c0_0 = arith.constant 0 : index
    %0 = vector.load %arg1[%c0, %c0_0] : memref<64x8xf32, #tpu.memory_space<vmem>>, vector<64x8xf32>
    %c0_1 = arith.constant 0 : index
    %c0_2 = arith.constant 0 : index
    %1 = vector.load %arg2[%c0_1, %c0_2] : memref<8x128xf32, #tpu.memory_space<vmem>>, vector<8x128xf32>
    %cst = arith.constant dense<0.000000e+00> : vector<64x128xf32>
    %2 = tpu.matmul %0, %1, %cst {dimension_numbers = #tpu.dot_dimension_numbers<[1], [0], [0], [1], [0, 0, 1, 1], [], []>} : vector<64x8xf32>, vector<8x128xf32>, vector<64x128xf32> -> vector<64x128xf32>
    %cst_3 = arith.constant 0.000000e+00 : f32
    %3 = vector.broadcast %cst_3 : f32 to vector<64x128xf32>
    %4 = arith.maximumf %2, %3 : vector<64x128xf32>
    %5 = vector.shape_cast %4 : vector<64x128xf32> to vector<8x8x128xf32>
    %cst_4 = arith.constant dense<0xFF800000> : vector<8x128xf32>
    %6 = vector.multi_reduction <maximumf>, %5, %cst_4 [0] : vector<8x8x128xf32> to vector<8x128xf32>
    %c0_5 = arith.constant 0 : index
    %c0_6 = arith.constant 0 : index
    %7 = vector.load %arg3[%c0_5, %c0_6] : memref<128x128xf32, #tpu.memory_space<vmem>>, vector<128x128xf32>
    %cst_7 = arith.constant dense<0.000000e+00> : vector<8x128xf32>
    %8 = tpu.matmul %6, %7, %cst_7 {dimension_numbers = #tpu.dot_dimension_numbers<[1], [0], [0], [1], [0, 0, 1, 1], [], []>} : vector<8x128xf32>, vector<128x128xf32>, vector<8x128xf32> -> vector<8x128xf32>
    %c0_8 = arith.constant 0 : index
    %c0_9 = arith.constant 0 : index
    %9 = vector.load %arg4[%c0_8, %c0_9] : memref<1x128xf32, #tpu.memory_space<vmem>>, vector<1x128xf32>
    %10 = vector.broadcast %9 : vector<1x128xf32> to vector<8x128xf32>
    %11 = arith.addf %8, %10 : vector<8x128xf32>
    %c0_10 = arith.constant 0 : index
    %c0_11 = arith.constant 0 : index
    %12 = vector.load %arg5[%c0_10, %c0_11] : memref<8x128xf32, #tpu.memory_space<vmem>>, vector<8x128xf32>
    tpu.vector_store %arg5[%c0_10, %c0_11], %11 {strides = array<i32>} : memref<8x128xf32, #tpu.memory_space<vmem>>, vector<8x128xf32>,
    return
  }
  func.func @transform_0(%arg0: i32) -> (i32, i32) {
    %c0_i32 = arith.constant 0 : i32
    %c0_i32_0 = arith.constant 0 : i32
    return %arg0, %c0_i32 : i32, i32
  }
  func.func @transform_1(%arg0: i32) -> (i32, i32) {
    %c0_i32 = arith.constant 0 : i32
    %c0_i32_0 = arith.constant 0 : i32
    %c0_i32_1 = arith.constant 0 : i32
    return %c0_i32, %c0_i32_0 : i32, i32
  }
  func.func @transform_2(%arg0: i32) -> (i32, i32) {
    %c0_i32 = arith.constant 0 : i32
    %c0_i32_0 = arith.constant 0 : i32
    %c0_i32_1 = arith.constant 0 : i32
    return %c0_i32, %c0_i32_0 : i32, i32
  }
  func.func @transform_3(%arg0: i32) -> (i32, i32) {
    %c0_i32 = arith.constant 0 : i32
    %c0_i32_0 = arith.constant 0 : i32
    %c0_i32_1 = arith.constant 0 : i32
    return %c0_i32, %c0_i32_0 : i32, i32
  }
  func.func @transform_4(%arg0: i32) -> (i32, i32) {
    %c0_i32 = arith.constant 0 : i32
    %c0_i32_0 = arith.constant 0 : i32
    return %arg0, %c0_i32 : i32, i32
  }
}

</mosaic_0001>

<llo_original>
// kernel: tpu_custom_call.1
$region0: #{tpu_custom_call.1}
  #allocation0 [shape = 'u32[]', space=smem, size = 0x4, offset = 0x4, fixed_abs, tag = 'smem constant byte address 0x4 - core index']
  #allocation1 [shape = 'u32[144,128]{1,0:T(1,128)}', space=vmem, size = 0x12000, scoped, tag = 'internal scratch']
  %s0 = inlined_call_operand.vmem [shape: f32[128,8], index: 0, kind: input, shape index: {}]
  %s1 = inlined_call_operand.vmem [shape: f32[8,128], index: 1, kind: input, shape index: {}]
  %s2 = inlined_call_operand.vmem [shape: f32[128,128], index: 2, kind: input, shape index: {}]
  %s3 = inlined_call_operand.vmem [shape: f32[1,128], index: 3, kind: input, shape index: {}]
  %s4 = inlined_call_operand.hbm [shape: f32[16,128], index: 4, kind: output, shape index: {}]
  %s5 = sld [smem:[#allocation0]]
  $region49: #{tpu_custom_call.1} parent=0
    _
  %s7 = ssub.s32 1, %s5
  %s8 = scalar_select 0, %s7, %s5
  $region1: #{tpu_custom_call.1} parent=0
    #allocation2 [shape = 'u8[8192]{0}', space=vmem, size = 0x2000, scoped, tag = 'output window, operand 0']
    #allocation3 [shape = 's32[2]{0}', space=sflag, size = 0x8, scoped, tag = 'scoped memory for tpu_custom_call.1']
    %9 = vsyncpa [#allocation3], 0
    %s10 = scalar_lea.sflag [#allocation3], 1
    %11 = vsyncpa %s10, 0
    loop: start=0, step=1, limit=4
    $region2: #{tpu_custom_call.1} parent=1 // loop_pre_header
      _
    $region3: #{tpu_custom_call.1} parent=1 // loop_header
      %s13 = sphi 0, %s17
      %p14 = scmp.ge.s32.totalorder %s13, 4
      %s23 = sphi 0, %s25
      %s26 = sphi 0, %s23
      %s27 = sphi 0, %s26
      %s43 = sphi 0, %s27
      %s47 = sphi 0, %s47
      %s49 = sphi 0, %s47
      %s50 = sphi 0, %s49
      %s64 = sphi 0, %s50
      %s68 = sphi 0, %s68
      %s70 = sphi 0, %s68
      %s71 = sphi 0, %s70
      %s85 = sphi 0, %s71
      %s89 = sphi 0, %s89
      %s91 = sphi 0, %s89
      %s92 = sphi 0, %s91
      %s106 = sphi 0, %s92
      %s112 = sphi 0, %s114
      %s115 = sphi 0, %s112
      %s116 = sphi 0, %s115
      %s132 = sphi 0, %s116
    $region4: #{tpu_custom_call.1} parent=1 // loop_header_branch
      %16 = sbr.rel (%p14) target = $region8
    $region5: #{tpu_custom_call.1} parent=1 // loop_body
      %s18 = ssub.s32 %s13, 1
      %s19 = ssub.s32 %s13, 2
      %s20 = sadd.s32 %s13, 1
      %s21 = ssub.s32 %s13, %s20
      %p22 = scmp.eq.s32.totalorder %s21, 0
      %s24 = sadd.s32 %s23, 1
      %s25 = scalar_select %p22, %s23, %s24
      %p28 = pneg %p22
      %p29 = scmp.eq.s32.totalorder %s13, 1
      %p30 = por %p28, %p29
      %p31 = scmp.ne.s32.totalorder %s23, %s26
      %p32 = scmp.eq.s32.totalorder %s13, 0
      %p33 = por %p31, %p32
      %p34 = scmp.ne.s32.totalorder %s23, %s26
      %p35 = scmp.eq.s32.totalorder %s18, 1
      %p36 = por %p34, %p35
      %p37 = scmp.ne.s32.totalorder %s26, %s27
      %p38 = scmp.eq.s32.totalorder %s18, 0
      %p39 = por %p37, %p38
      %p40 = scmp.ne.s32.totalorder %s26, %s27
      %p41 = scmp.eq.s32.totalorder %s19, 1
      %p42 = por %p40, %p41
      %p44 = scmp.ne.s32.totalorder %s27, %s43
      %p45 = scmp.eq.s32.totalorder %s19, 0
      %p46 = por %p44, %p45
      %s48 = sadd.s32 %s47, 1
      %p51 = scmp.eq.s32.totalorder %s13, 1
      %p52 = scmp.ne.s32.totalorder %s47, %s49
      %p53 = scmp.eq.s32.totalorder %s13, 0
      %p54 = por %p52, %p53
      %p55 = scmp.ne.s32.totalorder %s47, %s49
      %p56 = scmp.eq.s32.totalorder %s18, 1
      %p57 = por %p55, %p56
      %p58 = scmp.ne.s32.totalorder %s49, %s50
      %p59 = scmp.eq.s32.totalorder %s18, 0
      %p60 = por %p58, %p59
      %p61 = scmp.ne.s32.totalorder %s49, %s50
      %p62 = scmp.eq.s32.totalorder %s19, 1
      %p63 = por %p61, %p62
      %p65 = scmp.ne.s32.totalorder %s50, %s64
      %p66 = scmp.eq.s32.totalorder %s19, 0
      %p67 = por %p65, %p66
      %s69 = sadd.s32 %s68, 1
      %p72 = scmp.eq.s32.totalorder %s13, 1
      %p73 = scmp.ne.s32.totalorder %s68, %s70
      %p74 = scmp.eq.s32.totalorder %s13, 0
      %p75 = por %p73, %p74
      %p76 = scmp.ne.s32.totalorder %s68, %s70
      %p77 = scmp.eq.s32.totalorder %s18, 1
      %p78 = por %p76, %p77
      %p79 = scmp.ne.s32.totalorder %s70, %s71
      %p80 = scmp.eq.s32.totalorder %s18, 0
      %p81 = por %p79, %p80
      %p82 = scmp.ne.s32.totalorder %s70, %s71
      %p83 = scmp.eq.s32.totalorder %s19, 1
      %p84 = por %p82, %p83
      %p86 = scmp.ne.s32.totalorder %s71, %s85
      %p87 = scmp.eq.s32.totalorder %s19, 0
      %p88 = por %p86, %p87
      %s90 = sadd.s32 %s89, 1
      %p93 = scmp.eq.s32.totalorder %s13, 1
      %p94 = scmp.ne.s32.totalorder %s89, %s91
      %p95 = scmp.eq.s32.totalorder %s13, 0
      %p96 = por %p94, %p95
      %p97 = scmp.ne.s32.totalorder %s89, %s91
      %p98 = scmp.eq.s32.totalorder %s18, 1
      %p99 = por %p97, %p98
      %p100 = scmp.ne.s32.totalorder %s91, %s92
      %p101 = scmp.eq.s32.totalorder %s18, 0
      %p102 = por %p100, %p101
      %p103 = scmp.ne.s32.totalorder %s91, %s92
      %p104 = scmp.eq.s32.totalorder %s19, 1
      %p105 = por %p103, %p104
      %p107 = scmp.ne.s32.totalorder %s92, %s106
      %p108 = scmp.eq.s32.totalorder %s19, 0
      %p109 = por %p107, %p108
      %s110 = ssub.s32 %s13, %s20
      %p111 = scmp.eq.s32.totalorder %s110, 0
      %s113 = sadd.s32 %s112, 1
      %s114 = scalar_select %p111, %s112, %s113
      %p117 = pneg %p111
      %p118 = scmp.eq.s32.totalorder %s13, 1
      %p119 = por %p117, %p118
      %p120 = scmp.ne.s32.totalorder %s112, %s115
      %p121 = scmp.eq.s32.totalorder %s13, 0
      %p122 = por %p120, %p121
      %p123 = scmp.ne.s32.totalorder %s112, %s115
      %p124 = scmp.eq.s32.totalorder %s18, 1
      %p125 = por %p123, %p124
      %p126 = scmp.ne.s32.totalorder %s115, %s116
      %p127 = scmp.eq.s32.totalorder %s18, 0
      %p128 = por %p126, %p127
      %p129 = scmp.ne.s32.totalorder %s115, %s116
      %p130 = scmp.eq.s32.totalorder %s19, 1
      %p131 = por %p129, %p130
      %p133 = scmp.ne.s32.totalorder %s116, %s132
      %p134 = scmp.eq.s32.totalorder %s19, 0
      %p135 = por %p133, %p134
      %p136 = scmp.le.s32.totalorder 1, %s13
      %p137 = scmp.lt.s32.totalorder %s13, 3
      %p138 = pnand %p136, %p137
      %p139 = pneg %p138
      // Predicated region
      $region9: #{tpu_custom_call.1} parent=5 // pred_check
        _
      $region10: #{tpu_custom_call.1} parent=5 // pred_check_branch
        %141 = sbr.rel (%p138) target = $region12
      $region11: #{tpu_custom_call.1} parent=5 // pred_region
        %s142 = ssub.s32 %s13, 1
        // Predicated region
        $region13: #{tpu_custom_call.1} parent=11 // pred_check
          %p143 = pneg %p60
        $region14: #{tpu_custom_call.1} parent=11 // pred_check_branch
          %145 = sbr.rel (%p143) target = $region16
        $region15: #{tpu_custom_call.1} parent=11 // pred_region
          _
        $region16: #{tpu_custom_call.1} parent=11 // pred_fallthru
          _
        // Predicated region
        $region17: #{tpu_custom_call.1} parent=11 // pred_check
          %p146 = pneg %p81
        $region18: #{tpu_custom_call.1} parent=11 // pred_check_branch
          %148 = sbr.rel (%p146) target = $region20
        $region19: #{tpu_custom_call.1} parent=11 // pred_region
          _
        $region20: #{tpu_custom_call.1} parent=11 // pred_fallthru
          _
        // Predicated region
        $region21: #{tpu_custom_call.1} parent=11 // pred_check
          %p149 = pneg %p102
        $region22: #{tpu_custom_call.1} parent=11 // pred_check_branch
          %151 = sbr.rel (%p149) target = $region24
        $region23: #{tpu_custom_call.1} parent=11 // pred_region
          _
        $region24: #{tpu_custom_call.1} parent=11 // pred_fallthru
          _
      $region12: #{tpu_custom_call.1} parent=5 // pred_fallthru
        _
      %p152 = scmp.lt.s32.totalorder %s13, 2
      // Predicated region
      $region25: #{tpu_custom_call.1} parent=5 // pred_check
        %p153 = pneg %p152
      $region26: #{tpu_custom_call.1} parent=5 // pred_check_branch
        %155 = sbr.rel (%p153) target = $region28
      $region27: #{tpu_custom_call.1} parent=5 // pred_region
        // Predicated region
        $region29: #{tpu_custom_call.1} parent=27 // pred_check
          %p156 = pneg %p33
        $region30: #{tpu_custom_call.1} parent=27 // pred_check_branch
          %158 = sbr.rel (%p156) target = $region32
        $region31: #{tpu_custom_call.1} parent=27 // pred_region
          %s159 = smul.u32 8, %s13
          %p160 = scmp.lt.s32.totalorder %s159, 15
          %s161 = scalar_select %p160, %s159, 15
          %s162 = smul.addr %s161, 8
          %s163 = scalar_lea.vmem %s0, %s162
          %s164 = smul.u32 8, %s13
        $region32: #{tpu_custom_call.1} parent=27 // pred_fallthru
          _
      $region28: #{tpu_custom_call.1} parent=5 // pred_fallthru
        _
      %p165 = scmp.le.s32.totalorder 1, %s13
      %p166 = scmp.lt.s32.totalorder %s13, 3
      %p167 = pnand %p165, %p166
      %p168 = pneg %p167
      // Predicated region
      $region33: #{tpu_custom_call.1} parent=5 // pred_check
        _
      $region34: #{tpu_custom_call.1} parent=5 // pred_check_branch
        %170 = sbr.rel (%p167) target = $region36
      $region35: #{tpu_custom_call.1} parent=5 // pred_region
        %s171 = ssub.s32 %s13, 1
        %s172 = smul.u32 8, %s18
        %p173 = scmp.lt.s32.totalorder %s172, 15
        %s174 = scalar_select %p173, %s172, 15
        %s175 = smul.addr %s174, 8
        %s176 = scalar_lea.vmem %s0, %s175
        %p177 = pneg %p39
        %p178 = pneg %p36
        %p179 = pneg %p60
        %p180 = pneg %p57
        %p181 = pneg %p81
        %p182 = pneg %p78
        %p183 = pneg %p102
        %p184 = pneg %p99
        %p185 = pneg %p128
        %p186 = pneg %p125
        %s187 = sand.u32 %s115, 1
        %s188 = scalar_lea.sflag [#allocation3], %s187
        %s189 = sand.u32 %s115, 1
        %s190 = smul.addr %s189, 8
        %s191 = scalar_lea.vmem [#allocation2], %s190
        %s192 = smul.u32 8, %s18
        %p193 = scmp.lt.s32.totalorder %s192, 15
        %s194 = scalar_select %p193, %s192, 15
        %s195 = smul.addr %s194, 8
        %s196 = scalar_lea.vmem %s0, %s195
        %s197 = smul.u32 8, %s18
        %v198 = vld [vmem:[%s196] sm:$0xff]
        %v199 = vld [vmem:[%s196 + $0x8] sm:$0xff]
        %v200 = vld [vmem:[%s196 + $0x10] sm:$0xff]
        %v201 = vld [vmem:[%s196 + $0x18] sm:$0xff]
        %v202 = vld [vmem:[%s196 + $0x20] sm:$0xff]
        %v203 = vld [vmem:[%s196 + $0x28] sm:$0xff]
        %v204 = vld [vmem:[%s196 + $0x30] sm:$0xff]
        %v205 = vld [vmem:[%s196 + $0x38] sm:$0xff]
        %v206 = vld [vmem:[%s1] sm:$0xff]
        %vm207 = vcmask 64512
        %v209 = vsel %vm207, %v198, 0
        %v212 = vsel %vm207, %v199, 0
        %v215 = vsel %vm207, %v200, 0
        %v218 = vsel %vm207, %v201, 0
        %v221 = vsel %vm207, %v202, 0
        %v224 = vsel %vm207, %v203, 0
        %v227 = vsel %vm207, %v204, 0
        %v230 = vsel %vm207, %v205, 0
        %232 = vmatprep.subr.mxu0 0.0
        %233 = vmatpush1.msra.mxu0 %v206
        %234 = vmatprep.subr.mxu0 0.0
        %235 = vmatpush1.msra.mxu0 0.0
        %236 = vmatprep.subr.mxu0 0.0
        %237 = vmatpush1.msra.mxu0 0.0
        %238 = vmatprep.subr.mxu0 0.0
        %239 = vmatpush1.msra.mxu0 0.0
        %240 = vmatprep.subr.mxu0 0.0
        %241 = vmatpush1.msra.mxu0 0.0
        %242 = vmatprep.subr.mxu0 0.0
        %243 = vmatpush1.msra.mxu0 0.0
        %244 = vmatprep.subr.mxu0 0.0
        %245 = vmatpush1.msra.mxu0 0.0
        %246 = vmatprep.subr.mxu0 0.0
        %247 = vmatpush1.msra.mxu0 0.0
        %248 = vmatprep.subr.mxu0 0.0
        %249 = vmatpush1.msra.mxu0 0.0
        %250 = vmatprep.subr.mxu0 0.0
        %251 = vmatpush1.msra.mxu0 0.0
        %252 = vmatprep.subr.mxu0 0.0
        %253 = vmatpush1.msra.mxu0 0.0
        %254 = vmatprep.subr.mxu0 0.0
        %255 = vmatpush1.msra.mxu0 0.0
        %256 = vmatprep.subr.mxu0 0.0
        %257 = vmatpush1.msra.mxu0 0.0
        %258 = vmatprep.subr.mxu0 0.0
        %259 = vmatpush1.msra.mxu0 0.0
        %260 = vmatprep.subr.mxu0 0.0
        %261 = vmatpush1.msra.mxu0 0.0
        %262 = vmatprep.subr.mxu0 0.0
        %263 = vmatpush1.msra.mxu0 0.0
        %264 = vmatprep.subr.mxu0 0.0
        %265 = vmatpush1.msra.mxu0 0.0
        %266 = vmatprep.subr.mxu0 0.0
        %267 = vmatpush1.msra.mxu0 0.0
        %268 = vmatprep.subr.mxu0 0.0
        %269 = vmatpush1.msra.mxu0 0.0
        %270 = vmatprep.subr.mxu0 0.0
        %271 = vmatpush1.msra.mxu0 0.0
        %272 = vmatprep.subr.mxu0 0.0
        %273 = vmatpush1.msra.mxu0 0.0
        %274 = vmatprep.subr.mxu0 0.0
        %275 = vmatpush1.msra.mxu0 0.0
        %276 = vmatprep.subr.mxu0 0.0
        %277 = vmatpush1.msra.mxu0 0.0
        %278 = vmatprep.subr.mxu0 0.0
        %279 = vmatpush1.msra.mxu0 0.0
        %280 = vmatprep.subr.mxu0 0.0
        %281 = vmatpush1.msra.mxu0 0.0
        %282 = vmatprep.subr.mxu0 0.0
        %283 = vmatpush1.msra.mxu0 0.0
        %284 = vmatprep.subr.mxu0 0.0
        %285 = vmatpush1.msra.mxu0 0.0
        %286 = vmatprep.subr.mxu0 0.0
        %287 = vmatpush1.msra.mxu0 0.0
        %288 = vmatprep.subr.mxu0 0.0
        %289 = vmatpush1.msra.mxu0 0.0
        %290 = vmatprep.subr.mxu0 0.0
        %291 = vmatpush1.msra.mxu0 0.0
        %292 = vmatprep.subr.mxu0 0.0
        %293 = vmatpush1.msra.mxu0 0.0
        %294 = vmatprep.subr.mxu0 0.0
        %295 = vmatpush1.msra.mxu0 0.0
        %296 = vmatprep.mubr.f32.mxu0 0.0
        %297 = vmatmul.mubr.f32.gmra.mrb[0].mxu0 %v209
        %v298 = vpop.f32.mrb[0].mxu0
        %v299 = vadd.f32 0.0, %v298
        %v300 = vpop.f32.mrb[0].mxu0
        %301 = vmatprep.mubr.f32.mxu0 0.0
        %302 = vmatmul.mubr.f32.gmra.mrb[0].mxu0 %v212
        %v303 = vpop.f32.mrb[0].mxu0
        %v304 = vadd.f32 0.0, %v303
        %v305 = vpop.f32.mrb[0].mxu0
        %306 = vmatprep.mubr.f32.mxu0 0.0
        %307 = vmatmul.mubr.f32.gmra.mrb[0].mxu0 %v215
        %v308 = vpop.f32.mrb[0].mxu0
        %v309 = vadd.f32 0.0, %v308
        %v310 = vpop.f32.mrb[0].mxu0
        %311 = vmatprep.mubr.f32.mxu0 0.0
        %312 = vmatmul.mubr.f32.gmra.mrb[0].mxu0 %v218
        %v313 = vpop.f32.mrb[0].mxu0
        %v314 = vadd.f32 0.0, %v313
        %v315 = vpop.f32.mrb[0].mxu0
        %316 = vmatprep.mubr.f32.mxu0 0.0
        %317 = vmatmul.mubr.f32.gmra.mrb[0].mxu0 %v221
        %v318 = vpop.f32.mrb[0].mxu0
        %v319 = vadd.f32 0.0, %v318
        %v320 = vpop.f32.mrb[0].mxu0
        %321 = vmatprep.mubr.f32.mxu0 0.0
        %322 = vmatmul.mubr.f32.gmra.mrb[0].mxu0 %v224
        %v323 = vpop.f32.mrb[0].mxu0
        %v324 = vadd.f32 0.0, %v323
        %v325 = vpop.f32.mrb[0].mxu0
        %326 = vmatprep.mubr.f32.mxu0 0.0
        %327 = vmatmul.mubr.f32.gmra.mrb[0].mxu0 %v227
        %v328 = vpop.f32.mrb[0].mxu0
        %v329 = vadd.f32 0.0, %v328
        %v330 = vpop.f32.mrb[0].mxu0
        %331 = vmatprep.mubr.f32.mxu0 0.0
        %332 = vmatmul.mubr.f32.gmra.mrb[0].mxu0 %v230
        %v333 = vpop.f32.mrb[0].mxu0
        %v334 = vadd.f32 0.0, %v333
        %v335 = vpop.f32.mrb[0].mxu0
        %336 = vdwg.mxu0
        %v337 = vmax.f32 %v299, 0.0
        %v338 = vmax.f32 %v304, 0.0
        %v339 = vmax.f32 %v309, 0.0
        %v340 = vmax.f32 %v314, 0.0
        %v341 = vmax.f32 %v319, 0.0
        %v342 = vmax.f32 %v324, 0.0
        %v343 = vmax.f32 %v329, 0.0
        %v344 = vmax.f32 %v334, 0.0
        %v345 = vmax.f32 %v337, %v341
        %v346 = vmax.f32 %v338, %v342
        %v347 = vmax.f32 %v339, %v343
        %v348 = vmax.f32 %v340, %v344
        %v349 = vmax.f32 %v345, %v346
        %v350 = vmax.f32 %v347, %v348
        %v351 = vmax.f32 %v349, %v350
        %v352 = vld [vmem:[%s2] sm:$0xff]
        %v353 = vld [vmem:[%s2 + $0x8] sm:$0xff]
        %v354 = vld [vmem:[%s2 + $0x10] sm:$0xff]
        %v355 = vld [vmem:[%s2 + $0x18] sm:$0xff]
        %v356 = vld [vmem:[%s2 + $0x20] sm:$0xff]
        %v357 = vld [vmem:[%s2 + $0x28] sm:$0xff]
        %v358 = vld [vmem:[%s2 + $0x30] sm:$0xff]
        %v359 = vld [vmem:[%s2 + $0x38] sm:$0xff]
        %v360 = vld [vmem:[%s2 + $0x40] sm:$0xff]
        %v361 = vld [vmem:[%s2 + $0x48] sm:$0xff]
        %v362 = vld [vmem:[%s2 + $0x50] sm:$0xff]
        %v363 = vld [vmem:[%s2 + $0x58] sm:$0xff]
        %v364 = vld [vmem:[%s2 + $0x60] sm:$0xff]
        %v365 = vld [vmem:[%s2 + $0x68] sm:$0xff]
        %v366 = vld [vmem:[%s2 + $0x70] sm:$0xff]
        %v367 = vld [vmem:[%s2 + $0x78] sm:$0xff]
        %v368 = vld [vmem:[%s3] sm:$0x1]
        %v370 = vlaneseq
        %v371 = vshrl.u32 %v370, 7
        %v372 = vsub.s32 0, %v371
        %v373 = vrot.slane %v368, %v372
        %375 = vmatprep.subr.mxu0 0.0
        %376 = vmatpush1.msra.mxu0 %v352
        %377 = vmatprep.subr.mxu0 0.0
        %378 = vmatpush1.msra.mxu0 %v353
        %379 = vmatprep.subr.mxu0 0.0
        %380 = vmatpush1.msra.mxu0 %v354
        %381 = vmatprep.subr.mxu0 0.0
        %382 = vmatpush1.msra.mxu0 %v355
        %383 = vmatprep.subr.mxu0 0.0
        %384 = vmatpush1.msra.mxu0 %v356
        %385 = vmatprep.subr.mxu0 0.0
        %386 = vmatpush1.msra.mxu0 %v357
        %387 = vmatprep.subr.mxu0 0.0
        %388 = vmatpush1.msra.mxu0 %v358
        %389 = vmatprep.subr.mxu0 0.0
        %390 = vmatpush1.msra.mxu0 %v359
        %391 = vmatprep.subr.mxu0 0.0
        %392 = vmatpush1.msra.mxu0 %v360
        %393 = vmatprep.subr.mxu0 0.0
        %394 = vmatpush1.msra.mxu0 %v361
        %395 = vmatprep.subr.mxu0 0.0
        %396 = vmatpush1.msra.mxu0 %v362
        %397 = vmatprep.subr.mxu0 0.0
        %398 = vmatpush1.msra.mxu0 %v363
        %399 = vmatprep.subr.mxu0 0.0
        %400 = vmatpush1.msra.mxu0 %v364
        %401 = vmatprep.subr.mxu0 0.0
        %402 = vmatpush1.msra.mxu0 %v365
        %403 = vmatprep.subr.mxu0 0.0
        %404 = vmatpush1.msra.mxu0 %v366
        %405 = vmatprep.subr.mxu0 0.0
        %406 = vmatpush1.msra.mxu0 %v367
        %407 = vmatprep.subr.mxu0 0.0
        %408 = vmatpush1.msra.mxu0 0.0
        %409 = vmatprep.subr.mxu0 0.0
        %410 = vmatpush1.msra.mxu0 0.0
        %411 = vmatprep.subr.mxu0 0.0
        %412 = vmatpush1.msra.mxu0 0.0
        %413 = vmatprep.subr.mxu0 0.0
        %414 = vmatpush1.msra.mxu0 0.0
        %415 = vmatprep.subr.mxu0 0.0
        %416 = vmatpush1.msra.mxu0 0.0
        %417 = vmatprep.subr.mxu0 0.0
        %418 = vmatpush1.msra.mxu0 0.0
        %419 = vmatprep.subr.mxu0 0.0
        %420 = vmatpush1.msra.mxu0 0.0
        %421 = vmatprep.subr.mxu0 0.0
        %422 = vmatpush1.msra.mxu0 0.0
        %423 = vmatprep.subr.mxu0 0.0
        %424 = vmatpush1.msra.mxu0 0.0
        %425 = vmatprep.subr.mxu0 0.0
        %426 = vmatpush1.msra.mxu0 0.0
        %427 = vmatprep.subr.mxu0 0.0
        %428 = vmatpush1.msra.mxu0 0.0
        %429 = vmatprep.subr.mxu0 0.0
        %430 = vmatpush1.msra.mxu0 0.0
        %431 = vmatprep.subr.mxu0 0.0
        %432 = vmatpush1.msra.mxu0 0.0
        %433 = vmatprep.subr.mxu0 0.0
        %434 = vmatpush1.msra.mxu0 0.0
        %435 = vmatprep.subr.mxu0 0.0
        %436 = vmatpush1.msra.mxu0 0.0
        %437 = vmatprep.subr.mxu0 0.0
        %438 = vmatpush1.msra.mxu0 0.0
        %439 = vmatprep.mubr.f32.mxu0 0.0
        %440 = vmatmul.mubr.f32.gmra.mrb[0].mxu0 %v351
        %v441 = vpop.f32.mrb[0].mxu0
        %v442 = vadd.f32 %v373, %v441
        %v443 = vpop.f32.mrb[0].mxu0
        %444 = vdwg.mxu0
        %445 = vst [vmem:[%s191] sm:$0xff] %v442
        %s446 = sand.u32 %s115, 1
        %s447 = scalar_lea.sflag [#allocation3], %s446
        %s448 = sand.u32 %s115, 1
        %s449 = smul.addr %s448, 8
        %s450 = scalar_lea.vmem [#allocation2], %s449
        // Predicated region
        $region37: #{tpu_custom_call.1} parent=35 // pred_check
          %p451 = pneg %p125
        $region38: #{tpu_custom_call.1} parent=35 // pred_check_branch
          %453 = sbr.rel (%p451) target = $region40
        $region39: #{tpu_custom_call.1} parent=35 // pred_region
          %s455 = ssub.s32 128, 128
          %456 = vsyncadd %s447, %s455
          %s457 = smul.addr %s18, 128
          %s458 = scalar_lea.hbm %s4, %s457
          %s460 = sshll.u32 %s450, 4
          %s461 = int_to_ptr.vmem [resolvable:$true] %s460
          %463 = dma.vmem_to_hbm [thread:$0]  %s461, 128, %s458, %s447
        $region40: #{tpu_custom_call.1} parent=35 // pred_fallthru
          _
      $region36: #{tpu_custom_call.1} parent=5 // pred_fallthru
        _
      %p464 = scmp.le.s32.totalorder 2, %s13
      // Predicated region
      $region41: #{tpu_custom_call.1} parent=5 // pred_check
        %p465 = pneg %p464
      $region42: #{tpu_custom_call.1} parent=5 // pred_check_branch
        %467 = sbr.rel (%p465) target = $region44
      $region43: #{tpu_custom_call.1} parent=5 // pred_region
        %s468 = ssub.s32 %s13, 2
        // Predicated region
        $region45: #{tpu_custom_call.1} parent=43 // pred_check
          %p469 = pneg %p131
        $region46: #{tpu_custom_call.1} parent=43 // pred_check_branch
          %471 = sbr.rel (%p469) target = $region48
        $region47: #{tpu_custom_call.1} parent=43 // pred_region
          %s472 = sand.u32 %s116, 1
          %s473 = scalar_lea.sflag [#allocation3], %s472
          %s474 = sand.u32 %s116, 1
          %s475 = smul.addr %s474, 8
          %s476 = scalar_lea.vmem [#allocation2], %s475
          %477 = dma.done %s473, 128
        $region48: #{tpu_custom_call.1} parent=43 // pred_fallthru
          _
      $region44: #{tpu_custom_call.1} parent=5 // pred_fallthru
        _
    $region6: #{tpu_custom_call.1} parent=1 // loop_footer
      %s17 = sadd.s32 1, %s13
    $region7: #{tpu_custom_call.1} parent=1 // loop_footer_branch
      %12 = sbr.rel target = $region3
    $region8: #{tpu_custom_call.1} parent=1 // loop_exit
      _
    %478 = vsyncpa [#allocation3], 1
    %s479 = scalar_lea.sflag [#allocation3], 1
    %480 = vsyncpa %s479, 1

</llo_original>
